<compile_context>
chip_gen: v5e
topology: v5e:2x2
jax: 0.10.0
libtpu: 0.0.40
codegen_flags: <defaults>
</compile_context>

<pallas_src>
import jax
import jax.numpy as jnp
from jax.experimental import pallas as pl
from jax.experimental.pallas import tpu as pltpu

_LANE = 128  # TPU lane width; output last dim must be a multiple of this.


def _emotion_mixing_kernel(wT_ref, b_ref, xT_ref, oT_ref):
    # wT_ref: (E, E)   = mixing_weights^T   (resident, DMA'd once)
    # b_ref : (E, 1)   = bias column        (broadcasts over lanes/batch)
    # xT_ref: (E, TB)  = emotion_values^T tile, batch on lanes
    # oT_ref: (E, TB)  = output^T tile (lane-dense, unmasked stores)
    mixed = jnp.dot(wT_ref[...], xT_ref[...], preferred_element_type=jnp.float32)
    mixed = mixed + b_ref[...]
    oT_ref[...] = jnp.tanh(mixed).astype(oT_ref.dtype)


def emotion_mixing(emotion_values, mixing_weights, mixing_bias, *, tile_b=1024):
    """Forward of EmotionMixingLayer.

    emotion_values: [B, E] f32
    mixing_weights: [E, E] f32
    mixing_bias   : [E]    f32
    returns       : [B, E] f32  == tanh(emotion_values @ mixing_weights + mixing_bias)
    """
    B, E = emotion_values.shape

    # Pad the batch (lane) dimension up to a multiple of 128 and pick a tile
    # that divides it.  tile_b up to 1024 keeps VMEM usage tiny even on v7x
    # (double-buffered (E, 1024) f32 tiles ~ 64 KiB per stream).
    padded_b = max(_LANE, pl.cdiv(B, _LANE) * _LANE)
    tile_b = min(tile_b, padded_b)
    padded_b = pl.cdiv(padded_b, tile_b) * tile_b

    # Layout plumbing (one-time, outside the kernel): batch -> lanes.
    xT = jnp.transpose(emotion_values)            # (E, B)
    if padded_b != B:
        xT = jnp.pad(xT, ((0, 0), (0, padded_b - B)))
    wT = jnp.transpose(mixing_weights)            # (E, E)
    b_col = mixing_bias.reshape(E, 1)             # (E, 1)

    grid = (padded_b // tile_b,)

    oT = pl.pallas_call(
        _emotion_mixing_kernel,
        out_shape=jax.ShapeDtypeStruct((E, padded_b), emotion_values.dtype),
        grid=grid,
        in_specs=[
            pl.BlockSpec((E, E), lambda i: (0, 0)),        # W^T, resident
            pl.BlockSpec((E, 1), lambda i: (0, 0)),        # bias column, resident
            pl.BlockSpec((E, tile_b), lambda i: (0, i)),   # x^T batch tile
        ],
        out_specs=pl.BlockSpec((E, tile_b), lambda i: (0, i)),
        compiler_params=pltpu.CompilerParams(
            dimension_semantics=("parallel",),             # batch tiles independent
        ),
    )(wT, b_col, xT)

    # Back to the module's [B, E] layout, dropping batch padding.
    return jnp.transpose(oT[:, :B])


if __name__ == "__main__":
    key = jax.random.PRNGKey(0)
    k_x, k_w = jax.random.split(key)

    num_emotions = 8
    batch = 4

    # Deterministic parameter init mirroring the PyTorch __init__:
    #   mixing_weights = eye(E) + 0.01 * randn(E, E); mixing_bias = zeros(E)
    mixing_weights = (
        jnp.eye(num_emotions, dtype=jnp.float32)
        + 0.01 * jax.random.normal(k_w, (num_emotions, num_emotions), dtype=jnp.float32)
    )
    mixing_bias = jnp.zeros((num_emotions,), dtype=jnp.float32)

    # Example input: [batch, num_emotions]
    emotion_values = jax.random.normal(k_x, (batch, num_emotions), dtype=jnp.float32)

    out = emotion_mixing(emotion_values, mixing_weights, mixing_bias)
    out = jax.block_until_ready(out)

    # Cross-check against the plain-JAX reference.
    ref = jnp.tanh(emotion_values @ mixing_weights + mixing_bias)
    assert out.shape == (batch, num_emotions)
    assert jnp.allclose(out, ref, atol=1e-5, rtol=1e-5)

    print("KERNEL_OK")
</pallas_src>

<mosaic_0001>
module attributes {stable_mosaic.version = 11 : i64} {
  func.func @_emotion_mixing_kernel(%arg0: i32, %arg1: memref<8x8xf32, #tpu.memory_space<vmem>>, %arg2: memref<8x1xf32, #tpu.memory_space<vmem>>, %arg3: memref<8x128xf32, #tpu.memory_space<vmem>>, %arg4: memref<8x128xf32, #tpu.memory_space<vmem>>) attributes {dimension_semantics = [#tpu.dimension_semantics<parallel>], iteration_bounds = array<i64: 1>, scalar_prefetch = 0 : i64, scratch_operands = 0 : i64, tpu.core_type = #tpu.core_type<tc>, window_params = [{pipeline_mode = #tpu.pipeline_mode<synchronous>, transform_indices = @transform_0, window_bounds = array<i64: 8, 8>}, {pipeline_mode = #tpu.pipeline_mode<synchronous>, transform_indices = @transform_1, window_bounds = array<i64: 8, 1>}, {transform_indices = @transform_2, window_bounds = array<i64: 8, 128>}, {transform_indices = @transform_3, window_bounds = array<i64: 8, 128>}]} {
    %c0 = arith.constant 0 : index
    %c0_0 = arith.constant 0 : index
    %0 = vector.load %arg1[%c0, %c0_0] : memref<8x8xf32, #tpu.memory_space<vmem>>, vector<8x8xf32>
    %c0_1 = arith.constant 0 : index
    %c0_2 = arith.constant 0 : index
    %1 = vector.load %arg3[%c0_1, %c0_2] : memref<8x128xf32, #tpu.memory_space<vmem>>, vector<8x128xf32>
    %cst = arith.constant dense<0.000000e+00> : vector<8x128xf32>
    %2 = tpu.matmul %0, %1, %cst {dimension_numbers = #tpu.dot_dimension_numbers<[1], [0], [0], [1], [0, 0, 1, 1], [], []>} : vector<8x8xf32>, vector<8x128xf32>, vector<8x128xf32> -> vector<8x128xf32>
    %c0_3 = arith.constant 0 : index
    %c0_4 = arith.constant 0 : index
    %3 = vector.load %arg2[%c0_3, %c0_4] : memref<8x1xf32, #tpu.memory_space<vmem>>, vector<8x1xf32>
    %4 = vector.broadcast %3 : vector<8x1xf32> to vector<8x128xf32>
    %5 = arith.addf %2, %4 : vector<8x128xf32>
    %6 = math.tanh %5 : vector<8x128xf32>
    %c0_5 = arith.constant 0 : index
    %c0_6 = arith.constant 0 : index
    %7 = vector.load %arg4[%c0_5, %c0_6] : memref<8x128xf32, #tpu.memory_space<vmem>>, vector<8x128xf32>
    tpu.vector_store %arg4[%c0_5, %c0_6], %6 {strides = array<i32>} : memref<8x128xf32, #tpu.memory_space<vmem>>, vector<8x128xf32>,
    return
  }
  func.func @transform_0(%arg0: i32) -> (i32, i32) {
    %c0_i32 = arith.constant 0 : i32
    %c0_i32_0 = arith.constant 0 : i32
    %c0_i32_1 = arith.constant 0 : i32
    return %c0_i32, %c0_i32_0 : i32, i32
  }
  func.func @transform_1(%arg0: i32) -> (i32, i32) {
    %c0_i32 = arith.constant 0 : i32
    %c0_i32_0 = arith.constant 0 : i32
    %c0_i32_1 = arith.constant 0 : i32
    return %c0_i32, %c0_i32_0 : i32, i32
  }
  func.func @transform_2(%arg0: i32) -> (i32, i32) {
    %c0_i32 = arith.constant 0 : i32
    %c0_i32_0 = arith.constant 0 : i32
    return %c0_i32, %arg0 : i32, i32
  }
  func.func @transform_3(%arg0: i32) -> (i32, i32) {
    %c0_i32 = arith.constant 0 : i32
    %c0_i32_0 = arith.constant 0 : i32
    return %c0_i32, %arg0 : i32, i32
  }
}

</mosaic_0001>

<llo_original>
// kernel: tpu_custom_call.1
$region0: #{tpu_custom_call.1}
  #allocation0 [shape = 'u32[]', space=smem, size = 0x4, offset = 0x4, fixed_abs, tag = 'smem constant byte address 0x4 - core index']
  #allocation1 [shape = 'u32[72,128]{1,0:T(1,128)}', space=vmem, size = 0x9000, scoped, tag = 'internal scratch']
  %s0 = inlined_call_operand.vmem [shape: f32[8,8], index: 0, kind: input, shape index: {}]
  %s1 = inlined_call_operand.vmem [shape: f32[8,1], index: 1, kind: input, shape index: {}]
  %s2 = inlined_call_operand.hbm [shape: f32[8,128], index: 2, kind: input, shape index: {}]
  %s3 = inlined_call_operand.hbm [shape: f32[8,128], index: 3, kind: output, shape index: {}]
  %s4 = sld [smem:[#allocation0]]
  $region26: #{tpu_custom_call.1} parent=0
    _
  %s6 = ssub.s32 1, %s4
  %s7 = scalar_select 0, %s6, %s4
  $region1: #{tpu_custom_call.1} parent=0
    #allocation2 [shape = 'u8[4096]{0}', space=vmem, size = 0x1000, scoped, tag = 'input window, operand 2, single buffered']
    #allocation3 [shape = 's32[1]{0}', space=sflag, size = 0x4, scoped, tag = 'scoped memory for tpu_custom_call.1']
    #allocation4 [shape = 's32[1]{0}', space=sflag, size = 0x4, scoped, tag = 'scoped memory for tpu_custom_call.1']
    #allocation5 [shape = 'u8[4096]{0}', space=vmem, size = 0x1000, scoped, tag = 'output window, operand 0, single buffered']
    %8 = vsyncpa [#allocation3], 0
    %9 = vsyncpa [#allocation4], 0
    // Predicated region
    $region2: #{tpu_custom_call.1} parent=1 // pred_check
      _
    $region3: #{tpu_custom_call.1} parent=1 // pred_check_branch
      %11 = sbr.rel (0) target = $region5
    $region4: #{tpu_custom_call.1} parent=1 // pred_region
      _
    $region5: #{tpu_custom_call.1} parent=1 // pred_fallthru
      _
    // Predicated region
    $region6: #{tpu_custom_call.1} parent=1 // pred_check
      _
    $region7: #{tpu_custom_call.1} parent=1 // pred_check_branch
      %13 = sbr.rel (0) target = $region9
    $region8: #{tpu_custom_call.1} parent=1 // pred_region
      _
    $region9: #{tpu_custom_call.1} parent=1 // pred_fallthru
      _
    // Predicated region
    $region10: #{tpu_custom_call.1} parent=1 // pred_check
      _
    $region11: #{tpu_custom_call.1} parent=1 // pred_check_branch
      %15 = sbr.rel (0) target = $region13
    $region12: #{tpu_custom_call.1} parent=1 // pred_region
      %17 = vsyncadd [#allocation3], 0
      %s19 = sshll.u32 %s2, 4
      %s20 = int_to_ptr.hbm [resolvable:$true] %s19
      %s21 = sshll.u32 [#allocation2], 4
      %s22 = int_to_ptr.vmem [resolvable:$true] %s21
      %24 = dma.hbm_to_vmem [thread:$0]  %s20, 128, %s22, [#allocation3]
    $region13: #{tpu_custom_call.1} parent=1 // pred_fallthru
      _
    // Predicated region
    $region14: #{tpu_custom_call.1} parent=1 // pred_check
      _
    $region15: #{tpu_custom_call.1} parent=1 // pred_check_branch
      %26 = sbr.rel (0) target = $region17
    $region16: #{tpu_custom_call.1} parent=1 // pred_region
      %28 = dma.done [#allocation3], 128
    $region17: #{tpu_custom_call.1} parent=1 // pred_fallthru
      _
    %v29 = vld [vmem:[%s0] sm:$0xff]
    %v30 = vld [vmem:[#allocation2] sm:$0xff]
    %v31 = vld [vmem:[%s1] sm:$0xff]
    %33 = vset.pattern.permute.xlu0 0
    %34 = vperm.xlu0 %33, %v31
    %v35 = vpop.permute.xlu0 %34
    %vm37 = vcmask 64512
    %v39 = vsel %vm37, %v29, 0
    %41 = vmatpush.msra.mxu0 0.0
    %42 = vmatpush.msra.mxu0 0.0
    %43 = vmatpush.msra.mxu0 0.0
    %44 = vmatpush.msra.mxu0 0.0
    %45 = vmatpush.msra.mxu0 0.0
    %46 = vmatpush.msra.mxu0 0.0
    %47 = vmatpush.msra.mxu0 0.0
    %48 = vmatpush.msra.mxu0 0.0
    %49 = vmatpush.msra.mxu0 0.0
    %50 = vmatpush.msra.mxu0 0.0
    %51 = vmatpush.msra.mxu0 0.0
    %52 = vmatpush.msra.mxu0 0.0
    %53 = vmatpush.msra.mxu0 0.0
    %54 = vmatpush.msra.mxu0 0.0
    %55 = vmatpush.msra.mxu0 0.0
    %56 = vmatpush.msra.mxu0 %v30
    %57 = vmatmul.f32.gmra.mxu0 %v39
    %v58 = vpop.f32.mrf.mxu0
    %v59 = vadd.f32 %v35, %v58
    %60 = vdwg.mxu0
    %v61 = vtanh.pop %v59
    %62 = vst [vmem:[#allocation5] sm:$0xff] %v61
    // Predicated region
    $region18: #{tpu_custom_call.1} parent=1 // pred_check
      _
    $region19: #{tpu_custom_call.1} parent=1 // pred_check_branch
      %64 = sbr.rel (0) target = $region21
    $region20: #{tpu_custom_call.1} parent=1 // pred_region
      %66 = vsyncadd [#allocation4], 0
      %s68 = sshll.u32 [#allocation5], 4
      %s69 = int_to_ptr.vmem [resolvable:$true] %s68
      %s70 = sshll.u32 %s3, 4
      %s71 = int_to_ptr.hbm [resolvable:$true] %s70
      %73 = dma.vmem_to_hbm [thread:$0]  %s69, 128, %s71, [#allocation4]
    $region21: #{tpu_custom_call.1} parent=1 // pred_fallthru
      _
    // Predicated region
    $region22: #{tpu_custom_call.1} parent=1 // pred_check
      _
    $region23: #{tpu_custom_call.1} parent=1 // pred_check_branch
      %75 = sbr.rel (0) target = $region25
    $region24: #{tpu_custom_call.1} parent=1 // pred_region
      %77 = dma.done [#allocation4], 128
    $region25: #{tpu_custom_call.1} parent=1 // pred_fallthru
      _
    %78 = vsyncpa [#allocation3], 1
    %79 = vsyncpa [#allocation4], 1

</llo_original>
